<compile_context>
chip_gen: v6e
topology: v6e:2x2x1
jax: 0.10.0
libtpu: 0.0.40
codegen_flags: <defaults>
</compile_context>

<pallas_src>
import functools

import jax
import jax.numpy as jnp
from jax import lax
from jax.experimental import pallas as pl
from jax.experimental.pallas import tpu as pltpu


# ----------------------------- kernels -------------------------------------


def _bl_kernel_single_k(scale_ref, x_ref, w_ref, o_ref):
    """Whole K reduction in one block: no accumulator, no init/finalize phases."""
    xb = x_ref[...].astype(jnp.bfloat16)          # (tm, K)
    wb = w_ref[...].astype(jnp.bfloat16)          # (tn, K)  pre-binarized +-1/0
    res = lax.dot_general(                        # contract K of both -> (tm, tn)
        xb, wb, (((1,), (1,)), ((), ())),
        preferred_element_type=jnp.float32)
    # x @ (s * sign(W))^T == s * (x @ sign(W)^T): apply the XNOR scale once here.
    o_ref[...] = (res * scale_ref[0]).astype(o_ref.dtype)


def _bl_kernel_acc(scale_ref, x_ref, w_ref, o_ref, acc_ref):
    """K-tiled variant: grid = (M-tiles, N-tiles, K-tiles), K last ('arbitrary')."""
    k = pl.program_id(2)

    @pl.when(k == 0)
    def _():
        acc_ref[...] = jnp.zeros_like(acc_ref)

    xb = x_ref[...].astype(jnp.bfloat16)          # (tm, tk)
    wb = w_ref[...].astype(jnp.bfloat16)          # (tn, tk)
    acc_ref[...] += lax.dot_general(
        xb, wb, (((1,), (1,)), ((), ())),
        preferred_element_type=jnp.float32)

    @pl.when(k == pl.num_programs(2) - 1)
    def _():
        o_ref[...] = (acc_ref[...] * scale_ref[0]).astype(o_ref.dtype)


# --------------------------- tile selection ---------------------------------


def _largest_tile(dim, cap, granule):
    """Largest t <= cap that is a multiple of `granule` and divides `dim`.
    Returns `dim` itself if dim <= cap (full-extent blocks are always legal)."""
    if dim <= cap:
        return dim
    t = (cap // granule) * granule
    while t >= granule:
        if dim % t == 0:
            return t
        t -= granule
    return dim  # no aligned divisor under the cap; fall back to the full dim


def _pick_tiles(M, N, K, x_itemsize, out_itemsize,
                tm=None, tn=None, tk=None,
                vmem_budget=20 * 1024 * 1024):
    # tm: prefer multiples of 16 (bf16 sublane packing), cap at 256.
    if tm is None:
        tm = _largest_tile(M, 256, 16)
        if tm == M and M > 256:           # no 16-aligned divisor: try 8-aligned
            tm = _largest_tile(M, 256, 8)
    # tn: prefer 256-aligned (full MXU width on v6e/v7x), cap at 512.
    if tn is None:
        tn = _largest_tile(N, 512, 256)
        if tn == N and N > 512:
            tn = _largest_tile(N, 512, 128)
        # Ensure >= 2 parallel blocks so both v7x TensorCores get work.
        if (M // tm) * (N // tn) == 1 and tn >= 256 and tn % 256 == 0:
            tn //= 2                       # still a multiple of 128
    # tk: as large as the VMEM budget allows (ideally the whole K -> no accumulator).
    if tk is None:
        fixed = 2 * tm * tn * out_itemsize + tm * tn * 4      # out dbl-buf + f32 acc
        per_k = 2 * tm * x_itemsize + 2 * tn * 1              # x dbl-buf + int8 w dbl-buf
        tk_cap = max(128, (vmem_budget - fixed) // per_k)
        if K <= tk_cap:
            tk = K
        else:
            tk = _largest_tile(K, tk_cap, 256)
            if tk == K:                    # no 256-aligned divisor under the cap
                tk = _largest_tile(K, tk_cap, 128)
    return tm, tn, tk


# ------------------------------ wrapper -------------------------------------


def binary_linear(x, weight, xnor=False, *, tm=None, tn=None, tk=None):
    """Pallas implementation of BinaryLinear.forward for 2-D x."""
    M, K = x.shape
    N, K2 = weight.shape
    assert K == K2, "in_features mismatch"

    # Binarize once, store as int8 (+1 / 0 / -1): 4x less weight HBM traffic than f32,
    # and no per-tile sign() recomputation in the kernel hot loop.
    w_sign = jnp.sign(weight).astype(jnp.int8)

    if xnor:
        # scaling_factor = mean(|W|) (detached scalar) -- cheap glue, done in JAX.
        scale = jnp.mean(jnp.abs(weight)).astype(jnp.float32).reshape((1,))
    else:
        scale = jnp.ones((1,), dtype=jnp.float32)

    out_dtype = x.dtype
    tm, tn, tk = _pick_tiles(M, N, K, x.dtype.itemsize,
                             jnp.dtype(out_dtype).itemsize, tm=tm, tn=tn, tk=tk)
    assert M % tm == 0 and N % tn == 0 and K % tk == 0, \
        "shapes must tile evenly"  # TODO(synk): pad / mask edge tiles for ragged shapes

    grid_m, grid_n, grid_k = M // tm, N // tn, K // tk
    out_shape = jax.ShapeDtypeStruct((M, N), out_dtype)

    if grid_k == 1:
        # Small-batch / small-K fast path: whole reduction in one block, 2-D grid,
        # no accumulator scratch, no init/finalize phases.
        grid_spec = pltpu.PrefetchScalarGridSpec(
            num_scalar_prefetch=1,            # `scale` lands in SMEM
            grid=(grid_m, grid_n),
            in_specs=[
                pl.BlockSpec((tm, K), lambda i, j, s: (i, 0)),   # x tile
                pl.BlockSpec((tn, K), lambda i, j, s: (j, 0)),   # int8 sign(W) tile
            ],
            out_specs=pl.BlockSpec((tm, tn), lambda i, j, s: (i, j)),
        )
        kernel = _bl_kernel_single_k
        dims = ("parallel", "parallel")
    else:
        grid_spec = pltpu.PrefetchScalarGridSpec(
            num_scalar_prefetch=1,
            grid=(grid_m, grid_n, grid_k),
            in_specs=[
                pl.BlockSpec((tm, tk), lambda i, j, k, s: (i, k)),   # x tile
                pl.BlockSpec((tn, tk), lambda i, j, k, s: (j, k)),   # int8 sign(W) tile
            ],
            out_specs=pl.BlockSpec((tm, tn), lambda i, j, k, s: (i, j)),
            scratch_shapes=[pltpu.VMEM((tm, tn), jnp.float32)],
        )
        kernel = _bl_kernel_acc
        dims = ("parallel", "parallel", "arbitrary")

    return pl.pallas_call(
        kernel,
        out_shape=out_shape,
        grid_spec=grid_spec,
        compiler_params=pltpu.CompilerParams(dimension_semantics=dims),
    )(scale, x, w_sign)


# ------------------------------ reference -----------------------------------


def binary_linear_ref(x, weight, xnor=False):
    bw = jnp.sign(weight)
    if xnor:
        bw = bw * jnp.mean(jnp.abs(weight))
    return x @ bw.T


if __name__ == "__main__":
    key = jax.random.PRNGKey(0)
    kx, kw, kx2, kw2 = jax.random.split(key, 4)

    # ---- case 1: small batch, single-K fast path ----
    batch, in_features, out_features = 8, 128, 256
    # Deterministic "checkpoint-free" init matching torch.rand(...) * 0.01
    weight = jax.random.uniform(kw, (out_features, in_features), jnp.float32) * 0.01
    x = jax.random.normal(kx, (batch, in_features), jnp.float32)

    for xnor in (False, True):
        out = jax.block_until_ready(binary_linear(x, weight, xnor=xnor))
        assert out.shape == (batch, out_features)
        # Kernel uses bf16 activations on the MXU: compare tightly against the
        # bf16-rounded-activation reference, loosely against the pure f32 one.
        x_bf = x.astype(jnp.bfloat16).astype(jnp.float32)
        ref_bf = binary_linear_ref(x_bf, weight, xnor=xnor)
        ref_f32 = binary_linear_ref(x, weight, xnor=xnor)
        assert jnp.allclose(out, ref_bf, rtol=1e-5, atol=1e-5), f"mismatch vs bf16 ref (xnor={xnor})"
        assert jnp.allclose(out, ref_f32, rtol=2e-2, atol=1e-2), f"mismatch vs f32 ref (xnor={xnor})"

    # ---- case 2: force the K-tiled accumulator path ----
    batch2, in2, out2 = 16, 512, 256
    weight2 = jax.random.uniform(kw2, (out2, in2), jnp.float32) * 0.01
    x2 = jax.random.normal(kx2, (batch2, in2), jnp.float32)
    out = jax.block_until_ready(binary_linear(x2, weight2, xnor=True, tk=128))
    x2_bf = x2.astype(jnp.bfloat16).astype(jnp.float32)
    ref_bf = binary_linear_ref(x2_bf, weight2, xnor=True)
    assert out.shape == (batch2, out2)
    assert jnp.allclose(out, ref_bf, rtol=1e-5, atol=1e-5), "mismatch on K-tiled path"

    print("KERNEL_OK")
</pallas_src>

<mosaic_0001>
module attributes {stable_mosaic.version = 11 : i64} {
  func.func @_bl_kernel_single_k(%arg0: i32, %arg1: i32, %arg2: memref<1xf32, #tpu.memory_space<smem>>, %arg3: memref<8x128xf32, #tpu.memory_space<vmem>>, %arg4: memref<128x128xi8, #tpu.memory_space<vmem>>, %arg5: memref<8x128xf32, #tpu.memory_space<vmem>>) attributes {dimension_semantics = [#tpu.dimension_semantics<parallel>, #tpu.dimension_semantics<parallel>], iteration_bounds = array<i64: 1, 2>, scalar_prefetch = 1 : i64, scratch_operands = 0 : i64, tpu.core_type = #tpu.core_type<tc>, window_params = [{transform_indices = @transform_0, window_bounds = array<i64: 8, 128>}, {transform_indices = @transform_1, window_bounds = array<i64: 128, 128>}, {transform_indices = @transform_2, window_bounds = array<i64: 8, 128>}]} {
    %c0 = arith.constant 0 : index
    %c0_0 = arith.constant 0 : index
    %0 = vector.load %arg3[%c0, %c0_0] : memref<8x128xf32, #tpu.memory_space<vmem>>, vector<8x128xf32>
    %1 = arith.truncf %0 : vector<8x128xf32> to vector<8x128xbf16>
    %c0_1 = arith.constant 0 : index
    %c0_2 = arith.constant 0 : index
    %2 = vector.load %arg4[%c0_1, %c0_2] : memref<128x128xi8, #tpu.memory_space<vmem>>, vector<128x128xi8>
    %3 = arith.sitofp %2 : vector<128x128xi8> to vector<128x128xbf16>
    %cst = arith.constant dense<0.000000e+00> : vector<8x128xf32>
    %4 = tpu.matmul %1, %3, %cst {dimension_numbers = #tpu.dot_dimension_numbers<[1], [1], [0], [0], [0, 0, 1, 0], [], []>} : vector<8x128xbf16>, vector<128x128xbf16>, vector<8x128xf32> -> vector<8x128xf32>
    %c0_3 = arith.constant 0 : index
    %5 = memref.load %arg2[%c0_3] : memref<1xf32, #tpu.memory_space<smem>>
    %6 = vector.broadcast %5 : f32 to vector<8x128xf32>
    %7 = arith.mulf %4, %6 : vector<8x128xf32>
    %c0_4 = arith.constant 0 : index
    %c0_5 = arith.constant 0 : index
    %8 = vector.load %arg5[%c0_4, %c0_5] : memref<8x128xf32, #tpu.memory_space<vmem>>, vector<8x128xf32>
    tpu.vector_store %arg5[%c0_4, %c0_5], %7 {strides = array<i32>} : memref<8x128xf32, #tpu.memory_space<vmem>>, vector<8x128xf32>,
    return
  }
  func.func @transform_0(%arg0: i32, %arg1: i32, %arg2: memref<1xf32, #tpu.memory_space<smem>>) -> (i32, i32) {
    %c0_i32 = arith.constant 0 : i32
    %c0_i32_0 = arith.constant 0 : i32
    return %arg0, %c0_i32 : i32, i32
  }
  func.func @transform_1(%arg0: i32, %arg1: i32, %arg2: memref<1xf32, #tpu.memory_space<smem>>) -> (i32, i32) {
    %c0_i32 = arith.constant 0 : i32
    %c0_i32_0 = arith.constant 0 : i32
    return %arg1, %c0_i32 : i32, i32
  }
  func.func @transform_2(%arg0: i32, %arg1: i32, %arg2: memref<1xf32, #tpu.memory_space<smem>>) -> (i32, i32) {
    %c0_i32 = arith.constant 0 : i32
    return %arg0, %arg1 : i32, i32
  }
}

</mosaic_0001>

<llo_original>
// kernel: tpu_custom_call.1
$region0: #{tpu_custom_call.1}
  #allocation0 [shape = 'u32[]', space=smem, size = 0x4, offset = 0x4, fixed_abs, tag = 'smem constant byte address 0x4 - core index']
  #allocation1 [shape = 'u32[144,128]{1,0:T(1,128)}', space=vmem, size = 0x12000, scoped, tag = 'internal scratch']
  #allocation2 [shape = 's32[1]{0}', space=sflag, size = 0x4, scoped, tag = 'scoped memory for tpu_custom_call.1']
  #allocation3 [shape = 'f32[1]{0:T(128)S(6)}', space=smem, size = 0x200, scoped, tag = 'prefetched SMEM operand 0']
  %s0 = inlined_call_operand.<no memory space> [shape: f32[1], index: 0, kind: input, shape index: {}]
  %s1 = inlined_call_operand.hbm [shape: f32[8,128], index: 1, kind: input, shape index: {}]
  %s2 = inlined_call_operand.hbm [shape: s8[256,128], index: 2, kind: input, shape index: {}]
  %s3 = inlined_call_operand.hbm [shape: f32[8,256], index: 3, kind: output, shape index: {}]
  %s4 = sld [smem:[#allocation0]]
  $region49: #{tpu_custom_call.1} parent=0
    _
  %s6 = ssub.s32 1, %s4
  %s7 = scalar_select 0, %s6, %s4
  %8 = sst [smem:[#allocation3]] %s0
  $region1: #{tpu_custom_call.1} parent=0
    #allocation4 [shape = 'u8[4096]{0}', space=vmem, size = 0x1000, scoped, tag = 'input window, operand 1, single buffered']
    #allocation5 [shape = 's32[2]{0}', space=sflag, size = 0x8, scoped, tag = 'scoped memory for tpu_custom_call.1']
    #allocation6 [shape = 's32[2]{0}', space=sflag, size = 0x8, scoped, tag = 'scoped memory for tpu_custom_call.1']
    #allocation7 [shape = 'u8[32768]{0}', space=vmem, size = 0x8000, scoped, tag = 'input window, operand 2']
    #allocation8 [shape = 's32[2]{0}', space=sflag, size = 0x8, scoped, tag = 'scoped memory for tpu_custom_call.1']
    #allocation9 [shape = 'u8[8192]{0}', space=vmem, size = 0x2000, scoped, tag = 'output window, operand 0']
    %9 = vsyncpa [#allocation5], 0
    %10 = vsyncpa [#allocation8], 0
    %s11 = scalar_lea.sflag [#allocation8], 1
    %12 = vsyncpa %s11, 0
    %13 = vsyncpa [#allocation6], 0
    %s14 = scalar_lea.sflag [#allocation6], 1
    %15 = vsyncpa %s14, 0
    loop: start=0, step=1, limit=4
    $region2: #{tpu_custom_call.1} parent=1 // loop_pre_header
      _
    $region3: #{tpu_custom_call.1} parent=1 // loop_header
      %s17 = sphi 0, %s21
      %p18 = scmp.ge.s32.totalorder %s17, 4
      %s24 = sphi 0, %s36
      %s25 = sphi 0, %s32
      %s26 = sphi 0, %s24
      %s27 = sphi 0, %s25
      %s28 = sphi 0, %s26
      %s29 = sphi 0, %s27
      %s39 = sphi 0, %s41
      %s42 = sphi 0, %s39
      %s43 = sphi 0, %s42
      %s59 = sphi 0, %s43
      %s65 = sphi 0, %s67
      %s68 = sphi 0, %s65
      %s69 = sphi 0, %s68
      %s85 = sphi 0, %s69
      %s93 = sphi 0, %s95
      %s96 = sphi 0, %s93
      %s97 = sphi 0, %s96
      %s113 = sphi 0, %s97
    $region4: #{tpu_custom_call.1} parent=1 // loop_header_branch
      %20 = sbr.rel (%p18) target = $region8
    $region5: #{tpu_custom_call.1} parent=1 // loop_body
      %s22 = ssub.s32 %s17, 1
      %s23 = ssub.s32 %s17, 2
      %s30 = sadd.s32 1, %s25
      %p31 = scmp.ge.s32.totalorder %s30, 2
      %s32 = scalar_select %p31, 0, %s30
      %s33 = sadd.s32 1, %s24
      %s34 = scalar_select %p31, %s33, %s24
      %p35 = scmp.ge.s32.totalorder %s34, 1
      %s36 = scalar_select %p35, 0, %s34
      %s37 = ssub.s32 %s24, %s36
      %p38 = scmp.eq.s32.totalorder %s37, 0
      %s40 = sadd.s32 %s39, 1
      %s41 = scalar_select %p38, %s39, %s40
      %p44 = pneg %p38
      %p45 = scmp.eq.s32.totalorder %s17, 1
      %p46 = por %p44, %p45
      %p47 = scmp.ne.s32.totalorder %s39, %s42
      %p48 = scmp.eq.s32.totalorder %s17, 0
      %p49 = por %p47, %p48
      %p50 = scmp.ne.s32.totalorder %s39, %s42
      %p51 = scmp.eq.s32.totalorder %s22, 1
      %p52 = por %p50, %p51
      %p53 = scmp.ne.s32.totalorder %s42, %s43
      %p54 = scmp.eq.s32.totalorder %s22, 0
      %p55 = por %p53, %p54
      %p56 = scmp.ne.s32.totalorder %s42, %s43
      %p57 = scmp.eq.s32.totalorder %s23, 1
      %p58 = por %p56, %p57
      %p60 = scmp.ne.s32.totalorder %s43, %s59
      %p61 = scmp.eq.s32.totalorder %s23, 0
      %p62 = por %p60, %p61
      %s63 = ssub.s32 %s25, %s32
      %p64 = scmp.eq.s32.totalorder %s63, 0
      %s66 = sadd.s32 %s65, 1
      %s67 = scalar_select %p64, %s65, %s66
      %p70 = pneg %p64
      %p71 = scmp.eq.s32.totalorder %s17, 1
      %p72 = por %p70, %p71
      %p73 = scmp.ne.s32.totalorder %s65, %s68
      %p74 = scmp.eq.s32.totalorder %s17, 0
      %p75 = por %p73, %p74
      %p76 = scmp.ne.s32.totalorder %s65, %s68
      %p77 = scmp.eq.s32.totalorder %s22, 1
      %p78 = por %p76, %p77
      %p79 = scmp.ne.s32.totalorder %s68, %s69
      %p80 = scmp.eq.s32.totalorder %s22, 0
      %p81 = por %p79, %p80
      %p82 = scmp.ne.s32.totalorder %s68, %s69
      %p83 = scmp.eq.s32.totalorder %s23, 1
      %p84 = por %p82, %p83
      %p86 = scmp.ne.s32.totalorder %s69, %s85
      %p87 = scmp.eq.s32.totalorder %s23, 0
      %p88 = por %p86, %p87
      %s89 = ssub.s32 %s24, %s36
      %s90 = ssub.s32 %s25, %s32
      %s91 = sor.u32 %s89, %s90
      %p92 = scmp.eq.s32.totalorder %s91, 0
      %s94 = sadd.s32 %s93, 1
      %s95 = scalar_select %p92, %s93, %s94
      %p98 = pneg %p92
      %p99 = scmp.eq.s32.totalorder %s17, 1
      %p100 = por %p98, %p99
      %p101 = scmp.ne.s32.totalorder %s93, %s96
      %p102 = scmp.eq.s32.totalorder %s17, 0
      %p103 = por %p101, %p102
      %p104 = scmp.ne.s32.totalorder %s93, %s96
      %p105 = scmp.eq.s32.totalorder %s22, 1
      %p106 = por %p104, %p105
      %p107 = scmp.ne.s32.totalorder %s96, %s97
      %p108 = scmp.eq.s32.totalorder %s22, 0
      %p109 = por %p107, %p108
      %p110 = scmp.ne.s32.totalorder %s96, %s97
      %p111 = scmp.eq.s32.totalorder %s23, 1
      %p112 = por %p110, %p111
      %p114 = scmp.ne.s32.totalorder %s97, %s113
      %p115 = scmp.eq.s32.totalorder %s23, 0
      %p116 = por %p114, %p115
      %p117 = scmp.le.s32.totalorder 1, %s17
      %p118 = scmp.lt.s32.totalorder %s17, 3
      %p119 = pnand %p117, %p118
      %p120 = pneg %p119
      // Predicated region
      $region9: #{tpu_custom_call.1} parent=5 // pred_check
        _
      $region10: #{tpu_custom_call.1} parent=5 // pred_check_branch
        %122 = sbr.rel (%p119) target = $region12
      $region11: #{tpu_custom_call.1} parent=5 // pred_region
        %s123 = ssub.s32 %s17, 1
        // Predicated region
        $region13: #{tpu_custom_call.1} parent=11 // pred_check
          %p124 = pneg %p55
        $region14: #{tpu_custom_call.1} parent=11 // pred_check_branch
          %126 = sbr.rel (%p124) target = $region16
        $region15: #{tpu_custom_call.1} parent=11 // pred_region
          %s128 = ssub.s32 128, 128
          %129 = vsyncadd [#allocation5], %s128
          %s130 = smul.addr %s26, 128
          %s131 = scalar_lea.hbm %s1, %s130
          %s133 = sshll.u32 [#allocation4], 4
          %s134 = int_to_ptr.vmem [resolvable:$true] %s133
          %136 = dma.hbm_to_vmem [thread:$0]  %s131, 128, %s134, [#allocation5]
        $region16: #{tpu_custom_call.1} parent=11 // pred_fallthru
          _
      $region12: #{tpu_custom_call.1} parent=5 // pred_fallthru
        _
      %p137 = scmp.lt.s32.totalorder %s17, 2
      // Predicated region
      $region17: #{tpu_custom_call.1} parent=5 // pred_check
        %p138 = pneg %p137
      $region18: #{tpu_custom_call.1} parent=5 // pred_check_branch
        %140 = sbr.rel (%p138) target = $region20
      $region19: #{tpu_custom_call.1} parent=5 // pred_region
        // Predicated region
        $region21: #{tpu_custom_call.1} parent=19 // pred_check
          %p141 = pneg %p75
        $region22: #{tpu_custom_call.1} parent=19 // pred_check_branch
          %143 = sbr.rel (%p141) target = $region24
        $region23: #{tpu_custom_call.1} parent=19 // pred_region
          %s144 = sand.u32 %s65, 1
          %s145 = scalar_lea.sflag [#allocation8], %s144
          %s146 = sand.u32 %s65, 1
          %s147 = smul.addr %s146, 32
          %s148 = scalar_lea.vmem [#allocation7], %s147
          %s149 = smul.u32 4, %s25
          %s151 = ssub.s32 512, 512
          %152 = vsyncadd %s145, %s151
          %s153 = smul.addr %s149, 128
          %s154 = scalar_lea.hbm %s2, %s153
          %s155 = sshll.u32 %s148, 4
          %s156 = int_to_ptr.vmem [resolvable:$true] %s155
          %161 = dma.hbm_to_vmem [thread:$0]  %s154, 512, %s156, %s145, 128, 128, 8
        $region24: #{tpu_custom_call.1} parent=19 // pred_fallthru
          _
      $region20: #{tpu_custom_call.1} parent=5 // pred_fallthru
        _
      %p162 = scmp.le.s32.totalorder 1, %s17
      %p163 = scmp.lt.s32.totalorder %s17, 3
      %p164 = pnand %p162, %p163
      %p165 = pneg %p164
      // Predicated region
      $region25: #{tpu_custom_call.1} parent=5 // pred_check
        _
      $region26: #{tpu_custom_call.1} parent=5 // pred_check_branch
        %167 = sbr.rel (%p164) target = $region28
      $region27: #{tpu_custom_call.1} parent=5 // pred_region
        %s168 = ssub.s32 %s17, 1
        // Predicated region
        $region29: #{tpu_custom_call.1} parent=27 // pred_check
          %p169 = pneg %p55
        $region30: #{tpu_custom_call.1} parent=27 // pred_check_branch
          %171 = sbr.rel (%p169) target = $region32
        $region31: #{tpu_custom_call.1} parent=27 // pred_region
          %172 = dma.done [#allocation5], 128
        $region32: #{tpu_custom_call.1} parent=27 // pred_fallthru
          _
        %s173 = sand.u32 %s68, 1
        %s174 = scalar_lea.sflag [#allocation8], %s173
        %s175 = sand.u32 %s68, 1
        %s176 = smul.addr %s175, 32
        %s177 = scalar_lea.vmem [#allocation7], %s176
        // Predicated region
        $region33: #{tpu_custom_call.1} parent=27 // pred_check
          %p178 = pneg %p81
        $region34: #{tpu_custom_call.1} parent=27 // pred_check_branch
          %180 = sbr.rel (%p178) target = $region36
        $region35: #{tpu_custom_call.1} parent=27 // pred_region
          %181 = dma.done %s174, 512
        $region36: #{tpu_custom_call.1} parent=27 // pred_fallthru
          _
        %p182 = pneg %p55
        %p183 = pneg %p52
        %s184 = sand.u32 %s68, 1
        %s185 = scalar_lea.sflag [#allocation8], %s184
        %s186 = sand.u32 %s68, 1
        %s187 = smul.addr %s186, 32
        %s188 = scalar_lea.vmem [#allocation7], %s187
        %p189 = pneg %p81
        %p190 = pneg %p78
        %p191 = pneg %p109
        %p192 = pneg %p106
        %s193 = sand.u32 %s96, 1
        %s194 = scalar_lea.sflag [#allocation6], %s193
        %s195 = sand.u32 %s96, 1
        %s196 = smul.addr %s195, 8
        %s197 = scalar_lea.vmem [#allocation9], %s196
        %s198 = smul.u32 4, %s27
        %v200 = vld [vmem:[#allocation4] sm:$0xff]
        %v201 = vpack.c.bf16 %v200, %v200
        %v202 = vld [vmem:[%s177] sm:$0xff]
        %v203 = vld [vmem:[%s177 + $0x8] sm:$0xff]
        %v204 = vld [vmem:[%s177 + $0x10] sm:$0xff]
        %v205 = vld [vmem:[%s177 + $0x18] sm:$0xff]
        %v206 = vunpack.c.l.s8.bf16 %v202
        %v207 = vunpack.c.h.s8.bf16 %v202
        %v208 = vunpack.c.l.s8.bf16 %v203
        %v209 = vunpack.c.h.s8.bf16 %v203
        %v210 = vunpack.c.l.s8.bf16 %v204
        %v211 = vunpack.c.h.s8.bf16 %v204
        %v212 = vunpack.c.l.s8.bf16 %v205
        %v213 = vunpack.c.h.s8.bf16 %v205
        %214 = vmatprep.subr.bf16.mxu0 0
        %215 = vmatpush1.bf16.xpose.msra.mxu0 %v213
        %216 = vmatprep.subr.bf16.mxu0 0
        %217 = vmatpush1.bf16.xpose.msra.mxu0 %v212
        %218 = vmatprep.subr.bf16.mxu0 0
        %219 = vmatpush1.bf16.xpose.msra.mxu0 %v211
        %220 = vmatprep.subr.bf16.mxu0 0
        %221 = vmatpush1.bf16.xpose.msra.mxu0 %v210
        %222 = vmatprep.subr.bf16.mxu0 0
        %223 = vmatpush1.bf16.xpose.msra.mxu0 %v209
        %224 = vmatprep.subr.bf16.mxu0 0
        %225 = vmatpush1.bf16.xpose.msra.mxu0 %v208
        %226 = vmatprep.subr.bf16.mxu0 0
        %227 = vmatpush1.bf16.xpose.msra.mxu0 %v207
        %228 = vmatprep.subr.bf16.mxu0 0
        %229 = vmatpush1.bf16.xpose.msra.mxu0 %v206
        %230 = vmatprep.subr.bf16.mxu0 0
        %231 = vmatpush2.bf16.xpose.msra.mxu0 0
        %232 = vmatprep.subr.bf16.mxu0 0
        %233 = vmatpush2.bf16.xpose.msra.mxu0 0
        %234 = vmatprep.subr.bf16.mxu0 0
        %235 = vmatpush2.bf16.xpose.msra.mxu0 0
        %236 = vmatprep.subr.bf16.mxu0 0
        %237 = vmatpush2.bf16.xpose.msra.mxu0 0
        %238 = vmatprep.subr.bf16.mxu0 0
        %239 = vmatpush2.bf16.xpose.msra.mxu0 0
        %240 = vmatprep.subr.bf16.mxu0 0
        %241 = vmatpush2.bf16.xpose.msra.mxu0 0
        %242 = vmatprep.subr.bf16.mxu0 0
        %243 = vmatpush2.bf16.xpose.msra.mxu0 0
        %244 = vmatprep.subr.bf16.mxu0 0
        %245 = vmatpush2.bf16.xpose.msra.mxu0 0
        %246 = vmatprep.mubr.bf16.mxu0 0
        %247 = vmatmul.mubr.bf16.gmra.mxu0 %v201
        %v248 = vpop.f32.mrf.mxu0
        %v249 = vadd.f32 0.0, %v248
        %v250 = vpop.f32.mrf.mxu0
        %v251 = vpop.f32.mrf.mxu0
        %v252 = vpop.f32.mrf.mxu0
        %253 = vdwg.mxu0
        %s254 = sld [smem:[#allocation3]]
        %v255 = vstv %s254
        %v256 = vmul.f32 %v249, %v255
        %257 = vst [vmem:[%s197] sm:$0xff] %v256
        %s258 = sand.u32 %s96, 1
        %s259 = scalar_lea.sflag [#allocation6], %s258
        %s260 = sand.u32 %s96, 1
        %s261 = smul.addr %s260, 8
        %s262 = scalar_lea.vmem [#allocation9], %s261
        // Predicated region
        $region37: #{tpu_custom_call.1} parent=27 // pred_check
          %p263 = pneg %p106
        $region38: #{tpu_custom_call.1} parent=27 // pred_check_branch
          %265 = sbr.rel (%p263) target = $region40
        $region39: #{tpu_custom_call.1} parent=27 // pred_region
          %s267 = ssub.s32 128, 128
          %268 = vsyncadd %s259, %s267
          %s269 = smul.addr %s26, 2
          %s270 = sadd.s32 %s27, %s269
          %s271 = smul.addr %s270, 128
          %s272 = scalar_lea.hbm %s3, %s271
          %s274 = sshll.u32 %s262, 4
          %s275 = int_to_ptr.vmem [resolvable:$true] %s274
          %277 = dma.vmem_to_hbm [thread:$0]  %s275, 128, %s272, %s259
        $region40: #{tpu_custom_call.1} parent=27 // pred_fallthru
          _
      $region28: #{tpu_custom_call.1} parent=5 // pred_fallthru
        _
      %p278 = scmp.le.s32.totalorder 2, %s17
      // Predicated region
      $region41: #{tpu_custom_call.1} parent=5 // pred_check
        %p279 = pneg %p278
      $region42: #{tpu_custom_call.1} parent=5 // pred_check_branch
        %281 = sbr.rel (%p279) target = $region44
      $region43: #{tpu_custom_call.1} parent=5 // pred_region
        %s282 = ssub.s32 %s17, 2
        // Predicated region
        $region45: #{tpu_custom_call.1} parent=43 // pred_check
          %p283 = pneg %p112
        $region46: #{tpu_custom_call.1} parent=43 // pred_check_branch
          %285 = sbr.rel (%p283) target = $region48
        $region47: #{tpu_custom_call.1} parent=43 // pred_region
          %s286 = sand.u32 %s97, 1
          %s287 = scalar_lea.sflag [#allocation6], %s286
          %s288 = sand.u32 %s97, 1
          %s289 = smul.addr %s288, 8
          %s290 = scalar_lea.vmem [#allocation9], %s289
          %291 = dma.done %s287, 128
        $region48: #{tpu_custom_call.1} parent=43 // pred_fallthru
          _
      $region44: #{tpu_custom_call.1} parent=5 // pred_fallthru
        _
    $region6: #{tpu_custom_call.1} parent=1 // loop_footer
      %s21 = sadd.s32 1, %s17
    $region7: #{tpu_custom_call.1} parent=1 // loop_footer_branch
      %16 = sbr.rel target = $region3
    $region8: #{tpu_custom_call.1} parent=1 // loop_exit
      _
    %292 = vsyncpa [#allocation5], 1
    %s293 = scalar_lea.sflag [#allocation5], 1
    %294 = vsyncpa %s293, 1
    %295 = vsyncpa [#allocation8], 1
    %s296 = scalar_lea.sflag [#allocation8], 1
    %297 = vsyncpa %s296, 1
    %298 = vsyncpa [#allocation6], 1
    %s299 = scalar_lea.sflag [#allocation6], 1
    %300 = vsyncpa %s299, 1

</llo_original>
